<compile_context>
chip_gen: v5e
topology: v5e:2x2
jax: 0.10.0
libtpu: 0.0.40
codegen_flags: <defaults>
</compile_context>

<pallas_src>
import functools

import jax
import jax.numpy as jnp
from jax.experimental import pallas as pl
from jax.experimental.pallas import tpu as pltpu


# ---------------------------------------------------------------------------
# Pallas GRU kernel: one grid step == one chunk of T_CHUNK time steps.
# ---------------------------------------------------------------------------
def gru_chunk_kernel(xp_ref, wh_ref, bhn_ref, out_ref, hn_ref, h_scratch, *,
                     t_chunk, hidden):
    c = pl.program_id(0)

    @pl.when(c == 0)
    def _():
        # nn.GRU default: zero initial hidden state.
        h_scratch[...] = jnp.zeros_like(h_scratch)

    # Load weights / biases ONCE per chunk (not per time step); JAX does not CSE
    # re-broadcasts, so hoisting these out of the unrolled loop matters.
    w_h = wh_ref[...]                    # (H, 3H)  bf16 (or f32)
    b_hn = bhn_ref[...]                  # (1, H)   f32  (only the n-gate hidden bias)
    h = h_scratch[...]                   # (B, H)   f32

    H = hidden
    # Statically unrolled chunk loop -> static load/store offsets, LLO sees everything.
    for s in range(t_chunk):
        # x_t already contains  x_t @ W_i^T + b_i + [b_hr, b_hz, 0]  (precomputed).
        x_t = xp_ref[s]                  # (B, 3H) f32
        # Single fused hidden-state matmul for all three gates (r, z, n order).
        hp = jnp.dot(h.astype(w_h.dtype), w_h,
                     preferred_element_type=jnp.float32)          # (B, 3H) f32
        # PyTorch GRU gate equations:
        #   r = sigmoid(gi_r + gh_r + b_ir + b_hr)        (biases b_ir, b_hr folded into x_t)
        #   z = sigmoid(gi_z + gh_z + b_iz + b_hz)        (biases folded into x_t)
        #   n = tanh(gi_n + b_in + r * (gh_n + b_hn))     (b_hn must stay inside r*(.))
        #   h' = (1 - z) * n + z * h  ==  n + z * (h - n)
        r = jax.nn.sigmoid(x_t[:, 0:H] + hp[:, 0:H])
        z = jax.nn.sigmoid(x_t[:, H:2 * H] + hp[:, H:2 * H])
        n = jnp.tanh(x_t[:, 2 * H:] + r * (hp[:, 2 * H:] + b_hn))
        h = n + z * (h - n)
        out_ref[:, s, :] = h             # direct [B, T, H] layout (H is the lane axis)

    h_scratch[...] = h                   # carry hidden state to the next chunk

    @pl.when(c == pl.num_programs(0) - 1)
    def _():
        hn_ref[0] = h                    # final hidden state [1, B, H]


def _pick_time_chunk(t, max_chunk=32):
    """Chunk size: divides T and keeps the output block's second-minor dim either a
    multiple of 8 or equal to the full T (BlockSpec tiling rule)."""
    if t <= max_chunk:
        return t
    for c in range(max_chunk - (max_chunk % 8), 0, -8):
        if t % c == 0:
            return c
    return t  # fall back: whole sequence in one chunk


def auto_regressive_encoder_pallas(x, params, *, t_chunk=None,
                                   matmul_dtype=jnp.bfloat16):
    """Equivalent of AutoRegressiveEncoder.forward.

    x: [B, input_size, seq_len]  (float32-castable)
    returns (output [B, T, H], hidden [1, B, H]), both float32.
    """
    B, I, T = x.shape
    H = params["w_h"].shape[0]

    if t_chunk is None:
        t_chunk = _pick_time_chunk(T)
    assert T % t_chunk == 0
    n_chunks = T // t_chunk

    # ---- time-parallel input projection (hoisted out of the recurrence) ----
    # One big gemm over all T*B rows; bf16 operands fill the MXU, f32 accumulation.
    x_tbi = jnp.transpose(x.astype(jnp.float32), (2, 0, 1))          # [T, B, I]
    x_proj = jnp.dot(x_tbi.reshape(T * B, I).astype(matmul_dtype),
                     params["w_i"].astype(matmul_dtype),
                     preferred_element_type=jnp.float32).reshape(T, B, 3 * H)

    # Fold ALL loop-invariant biases into the time-parallel term:
    #   b_i (all gates) and the r/z parts of b_h.  b_hn cannot be folded (it is
    #   multiplied by r inside the n-gate), so it goes into the kernel separately.
    b_h = params["b_h"]                                               # (1, 3H)
    bias_fold = params["b_i"] + jnp.concatenate(
        [b_h[:, :2 * H], jnp.zeros((1, H), b_h.dtype)], axis=1)       # (1, 3H)
    x_proj = x_proj + bias_fold[None]                                 # [T, B, 3H] f32
    b_hn = b_h[:, 2 * H:]                                             # (1, H)  f32

    w_h = params["w_h"].astype(matmul_dtype)                          # (H, 3H)

    kernel = functools.partial(gru_chunk_kernel, t_chunk=t_chunk, hidden=H)

    grid_spec = pltpu.PrefetchScalarGridSpec(
        num_scalar_prefetch=0,
        grid=(n_chunks,),
        in_specs=[
            pl.BlockSpec((t_chunk, B, 3 * H), lambda c: (c, 0, 0)),   # x_proj chunk
            pl.BlockSpec((H, 3 * H), lambda c: (0, 0)),               # fused W_h^T (resident)
            pl.BlockSpec((1, H), lambda c: (0, 0)),                   # b_hn (resident)
        ],
        out_specs=[
            pl.BlockSpec((B, t_chunk, H), lambda c: (0, c, 0)),       # output slab [B,T,H]
            pl.BlockSpec((1, B, H), lambda c: (0, 0, 0)),             # final hidden
        ],
        scratch_shapes=[pltpu.VMEM((B, H), jnp.float32)],             # resident h state
    )

    output, h_n = pl.pallas_call(
        kernel,
        out_shape=(
            jax.ShapeDtypeStruct((B, T, H), jnp.float32),
            jax.ShapeDtypeStruct((1, B, H), jnp.float32),
        ),
        grid_spec=grid_spec,
        # Time/chunk axis is a genuine recurrence -> must stay "arbitrary".
        # (For large H on v7x, also raise vmem_limit_bytes so bf16 W_h stays resident.)
        compiler_params=pltpu.CompilerParams(
            dimension_semantics=("arbitrary",)),
    )(x_proj, w_h, b_hn)

    return output, h_n


# ---------------------------------------------------------------------------
# Pure-JAX float32 reference (faithful nn.GRU math) for correctness check.
# ---------------------------------------------------------------------------
def auto_regressive_encoder_ref(x, params):
    B, I, T = x.shape
    H = params["w_h"].shape[0]
    x_tbi = jnp.transpose(x.astype(jnp.float32), (2, 0, 1))           # [T, B, I]

    def step(h, x_t):
        gi = x_t @ params["w_i"] + params["b_i"]                       # (B, 3H)
        gh = h @ params["w_h"] + params["b_h"]                         # (B, 3H)
        r = jax.nn.sigmoid(gi[:, :H] + gh[:, :H])
        z = jax.nn.sigmoid(gi[:, H:2 * H] + gh[:, H:2 * H])
        n = jnp.tanh(gi[:, 2 * H:] + r * gh[:, 2 * H:])
        h_new = (1.0 - z) * n + z * h
        return h_new, h_new

    h0 = jnp.zeros((B, H), jnp.float32)
    h_last, outs = jax.lax.scan(step, h0, x_tbi)
    return jnp.transpose(outs, (1, 0, 2)), h_last[None]


# ---------------------------------------------------------------------------
# Deterministic parameter init (fused gate layout, shapes as nn.GRU(input, size)).
# Gate order r, z, n; weights stored transposed so x @ w == x @ W^T.
# ---------------------------------------------------------------------------
def init_gru_params(key, input_size, hidden):
    k = 1.0 / jnp.sqrt(jnp.float32(hidden))
    keys = jax.random.split(key, 12)
    u = lambda kk, shape: jax.random.uniform(kk, shape, jnp.float32, -k, k)
    w_ir, w_iz, w_in = (u(keys[0], (input_size, hidden)),
                        u(keys[1], (input_size, hidden)),
                        u(keys[2], (input_size, hidden)))
    w_hr, w_hz, w_hn = (u(keys[3], (hidden, hidden)),
                        u(keys[4], (hidden, hidden)),
                        u(keys[5], (hidden, hidden)))
    b_ir, b_iz, b_in = u(keys[6], (1, hidden)), u(keys[7], (1, hidden)), u(keys[8], (1, hidden))
    b_hr, b_hz, b_hn = u(keys[9], (1, hidden)), u(keys[10], (1, hidden)), u(keys[11], (1, hidden))
    return {
        "w_i": jnp.concatenate([w_ir, w_iz, w_in], axis=1),   # (I, 3H)
        "w_h": jnp.concatenate([w_hr, w_hz, w_hn], axis=1),   # (H, 3H)
        "b_i": jnp.concatenate([b_ir, b_iz, b_in], axis=1),   # (1, 3H)
        "b_h": jnp.concatenate([b_hr, b_hz, b_hn], axis=1),   # (1, 3H)
    }


if __name__ == "__main__":
    BATCH, INPUT_SIZE, SEQ_LEN, HIDDEN = 2, 4, 8, 32

    key = jax.random.PRNGKey(0)
    k_x, k_p = jax.random.split(key)
    x = jax.random.normal(k_x, (BATCH, INPUT_SIZE, SEQ_LEN), jnp.float32)
    params = init_gru_params(k_p, INPUT_SIZE, HIDDEN)

    fwd = jax.jit(auto_regressive_encoder_pallas)
    out, h_n = fwd(x, params)
    out = jax.block_until_ready(out)
    h_n = jax.block_until_ready(h_n)

    out_ref, h_ref = auto_regressive_encoder_ref(x, params)
    assert out.shape == (BATCH, SEQ_LEN, HIDDEN)
    assert h_n.shape == (1, BATCH, HIDDEN)
    # Kernel uses bf16 matmul operands (f32 accumulation); compare to the pure-f32
    # reference with a tolerance covering the bf16 quantization of x / weights / h.
    assert jnp.allclose(out, out_ref, atol=3e-2, rtol=3e-2)
    assert jnp.allclose(h_n, h_ref, atol=3e-2, rtol=3e-2)
    # Internal consistency: last output step must equal the returned hidden state.
    assert jnp.allclose(out[:, -1, :], h_n[0], atol=1e-6)

    print("KERNEL_OK")
</pallas_src>

<mosaic_0001>
module attributes {stable_mosaic.version = 11 : i64} {
  func.func @gru_chunk_kernel(%arg0: i32, %arg1: memref<8x2x96xf32, #tpu.memory_space<vmem>>, %arg2: memref<32x96xbf16, #tpu.memory_space<vmem>>, %arg3: memref<1x32xf32, #tpu.memory_space<vmem>>, %arg4: memref<2x8x32xf32, #tpu.memory_space<vmem>>, %arg5: memref<1x2x32xf32, #tpu.memory_space<vmem>>, %arg6: memref<2x32xf32, #tpu.memory_space<vmem>>) attributes {dimension_semantics = [#tpu.dimension_semantics<arbitrary>], iteration_bounds = array<i64: 1>, scalar_prefetch = 0 : i64, scratch_operands = 1 : i64, tpu.core_type = #tpu.core_type<tc>, window_params = [{transform_indices = @transform_0, window_bounds = array<i64: 8, 2, 96>}, {pipeline_mode = #tpu.pipeline_mode<synchronous>, transform_indices = @transform_1, window_bounds = array<i64: 32, 96>}, {pipeline_mode = #tpu.pipeline_mode<synchronous>, transform_indices = @transform_2, window_bounds = array<i64: 1, 32>}, {transform_indices = @transform_3, window_bounds = array<i64: 2, 8, 32>}, {pipeline_mode = #tpu.pipeline_mode<synchronous>, transform_indices = @transform_4, window_bounds = array<i64: 1, 2, 32>}]} {
    %c0_i32 = arith.constant 0 : i32
    %0 = arith.cmpi eq, %arg0, %c0_i32 : i32
    %1 = arith.extui %0 : i1 to i32
    %c0_i32_0 = arith.constant 0 : i32
    %2 = arith.cmpi ne, %1, %c0_i32_0 : i32
    scf.if %2 {
      %cst_74 = arith.constant 0.000000e+00 : f32
      %274 = vector.broadcast %cst_74 : f32 to vector<2x32xf32>
      %c0_75 = arith.constant 0 : index
      %c0_76 = arith.constant 0 : index
      %275 = vector.load %arg6[%c0_75, %c0_76] : memref<2x32xf32, #tpu.memory_space<vmem>>, vector<2x32xf32>
      tpu.vector_store %arg6[%c0_75, %c0_76], %274 {strides = array<i32>} : memref<2x32xf32, #tpu.memory_space<vmem>>, vector<2x32xf32>,
    } else {
    }
    %c0 = arith.constant 0 : index
    %c0_1 = arith.constant 0 : index
    %3 = vector.load %arg2[%c0, %c0_1] : memref<32x96xbf16, #tpu.memory_space<vmem>>, vector<32x96xbf16>
    %c0_2 = arith.constant 0 : index
    %c0_3 = arith.constant 0 : index
    %4 = vector.load %arg3[%c0_2, %c0_3] : memref<1x32xf32, #tpu.memory_space<vmem>>, vector<1x32xf32>
    %c0_4 = arith.constant 0 : index
    %c0_5 = arith.constant 0 : index
    %5 = vector.load %arg6[%c0_4, %c0_5] : memref<2x32xf32, #tpu.memory_space<vmem>>, vector<2x32xf32>
    %c0_6 = arith.constant 0 : index
    %c0_7 = arith.constant 0 : index
    %c0_8 = arith.constant 0 : index
    %6 = vector.load %arg1[%c0_6, %c0_7, %c0_8] : memref<8x2x96xf32, #tpu.memory_space<vmem>>, vector<1x2x96xf32>
    %7 = vector.shape_cast %6 : vector<1x2x96xf32> to vector<2x96xf32>
    %8 = arith.truncf %5 : vector<2x32xf32> to vector<2x32xbf16>
    %cst = arith.constant dense<0.000000e+00> : vector<2x96xf32>
    %9 = tpu.matmul %8, %3, %cst {dimension_numbers = #tpu.dot_dimension_numbers<[1], [0], [0], [1], [0, 0, 1, 1], [], []>} : vector<2x32xbf16>, vector<32x96xbf16>, vector<2x96xf32> -> vector<2x96xf32>
    %10 = vector.extract_strided_slice %7 {offsets = [0, 0], sizes = [2, 32], strides = [1, 1]} : vector<2x96xf32> to vector<2x32xf32>
    %11 = vector.extract_strided_slice %9 {offsets = [0, 0], sizes = [2, 32], strides = [1, 1]} : vector<2x96xf32> to vector<2x32xf32>
    %12 = arith.addf %10, %11 : vector<2x32xf32>
    %13 = arith.negf %12 : vector<2x32xf32>
    %14 = math.exp %13 : vector<2x32xf32>
    %cst_9 = arith.constant 1.000000e+00 : f32
    %15 = vector.broadcast %cst_9 : f32 to vector<2x32xf32>
    %16 = arith.addf %15, %14 : vector<2x32xf32>
    %17 = arith.divf %15, %16 : vector<2x32xf32>
    %18 = vector.extract_strided_slice %7 {offsets = [0, 32], sizes = [2, 32], strides = [1, 1]} : vector<2x96xf32> to vector<2x32xf32>
    %19 = vector.extract_strided_slice %9 {offsets = [0, 32], sizes = [2, 32], strides = [1, 1]} : vector<2x96xf32> to vector<2x32xf32>
    %20 = arith.addf %18, %19 : vector<2x32xf32>
    %21 = arith.negf %20 : vector<2x32xf32>
    %22 = math.exp %21 : vector<2x32xf32>
    %cst_10 = arith.constant 1.000000e+00 : f32
    %23 = vector.broadcast %cst_10 : f32 to vector<2x32xf32>
    %24 = arith.addf %23, %22 : vector<2x32xf32>
    %25 = arith.divf %23, %24 : vector<2x32xf32>
    %26 = vector.extract_strided_slice %7 {offsets = [0, 64], sizes = [2, 32], strides = [1, 1]} : vector<2x96xf32> to vector<2x32xf32>
    %27 = vector.extract_strided_slice %9 {offsets = [0, 64], sizes = [2, 32], strides = [1, 1]} : vector<2x96xf32> to vector<2x32xf32>
    %28 = vector.broadcast %4 : vector<1x32xf32> to vector<2x32xf32>
    %29 = arith.addf %27, %28 : vector<2x32xf32>
    %30 = arith.mulf %17, %29 : vector<2x32xf32>
    %31 = arith.addf %26, %30 : vector<2x32xf32>
    %32 = math.tanh %31 : vector<2x32xf32>
    %33 = arith.subf %5, %32 : vector<2x32xf32>
    %34 = arith.mulf %25, %33 : vector<2x32xf32>
    %35 = arith.addf %32, %34 : vector<2x32xf32>
    %c0_11 = arith.constant 0 : index
    %c0_12 = arith.constant 0 : index
    %c0_13 = arith.constant 0 : index
    %36 = vector.load %arg4[%c0_11, %c0_12, %c0_13] : memref<2x8x32xf32, #tpu.memory_space<vmem>>, vector<2x1x32xf32>
    %37 = vector.shape_cast %36 : vector<2x1x32xf32> to vector<2x32xf32>
    %38 = vector.shape_cast %35 : vector<2x32xf32> to vector<2x1x32xf32>
    tpu.vector_store %arg4[%c0_11, %c0_12, %c0_13], %38 {strides = array<i32>} : memref<2x8x32xf32, #tpu.memory_space<vmem>>, vector<2x1x32xf32>,
    %c1 = arith.constant 1 : index
    %c0_14 = arith.constant 0 : index
    %c0_15 = arith.constant 0 : index
    %39 = vector.load %arg1[%c1, %c0_14, %c0_15] : memref<8x2x96xf32, #tpu.memory_space<vmem>>, vector<1x2x96xf32>
    %40 = vector.shape_cast %39 : vector<1x2x96xf32> to vector<2x96xf32>
    %41 = arith.truncf %35 : vector<2x32xf32> to vector<2x32xbf16>
    %cst_16 = arith.constant dense<0.000000e+00> : vector<2x96xf32>
    %42 = tpu.matmul %41, %3, %cst_16 {dimension_numbers = #tpu.dot_dimension_numbers<[1], [0], [0], [1], [0, 0, 1, 1], [], []>} : vector<2x32xbf16>, vector<32x96xbf16>, vector<2x96xf32> -> vector<2x96xf32>
    %43 = vector.extract_strided_slice %40 {offsets = [0, 0], sizes = [2, 32], strides = [1, 1]} : vector<2x96xf32> to vector<2x32xf32>
    %44 = vector.extract_strided_slice %42 {offsets = [0, 0], sizes = [2, 32], strides = [1, 1]} : vector<2x96xf32> to vector<2x32xf32>
    %45 = arith.addf %43, %44 : vector<2x32xf32>
    %46 = arith.negf %45 : vector<2x32xf32>
    %47 = math.exp %46 : vector<2x32xf32>
    %cst_17 = arith.constant 1.000000e+00 : f32
    %48 = vector.broadcast %cst_17 : f32 to vector<2x32xf32>
    %49 = arith.addf %48, %47 : vector<2x32xf32>
    %50 = arith.divf %48, %49 : vector<2x32xf32>
    %51 = vector.extract_strided_slice %40 {offsets = [0, 32], sizes = [2, 32], strides = [1, 1]} : vector<2x96xf32> to vector<2x32xf32>
    %52 = vector.extract_strided_slice %42 {offsets = [0, 32], sizes = [2, 32], strides = [1, 1]} : vector<2x96xf32> to vector<2x32xf32>
    %53 = arith.addf %51, %52 : vector<2x32xf32>
    %54 = arith.negf %53 : vector<2x32xf32>
    %55 = math.exp %54 : vector<2x32xf32>
    %cst_18 = arith.constant 1.000000e+00 : f32
    %56 = vector.broadcast %cst_18 : f32 to vector<2x32xf32>
    %57 = arith.addf %56, %55 : vector<2x32xf32>
    %58 = arith.divf %56, %57 : vector<2x32xf32>
    %59 = vector.extract_strided_slice %40 {offsets = [0, 64], sizes = [2, 32], strides = [1, 1]} : vector<2x96xf32> to vector<2x32xf32>
    %60 = vector.extract_strided_slice %42 {offsets = [0, 64], sizes = [2, 32], strides = [1, 1]} : vector<2x96xf32> to vector<2x32xf32>
    %61 = vector.broadcast %4 : vector<1x32xf32> to vector<2x32xf32>
    %62 = arith.addf %60, %61 : vector<2x32xf32>
    %63 = arith.mulf %50, %62 : vector<2x32xf32>
    %64 = arith.addf %59, %63 : vector<2x32xf32>
    %65 = math.tanh %64 : vector<2x32xf32>
    %66 = arith.subf %35, %65 : vector<2x32xf32>
    %67 = arith.mulf %58, %66 : vector<2x32xf32>
    %68 = arith.addf %65, %67 : vector<2x32xf32>
    %c0_19 = arith.constant 0 : index
    %c1_20 = arith.constant 1 : index
    %c0_21 = arith.constant 0 : index
    %69 = vector.load %arg4[%c0_19, %c1_20, %c0_21] : memref<2x8x32xf32, #tpu.memory_space<vmem>>, vector<2x1x32xf32>
    %70 = vector.shape_cast %69 : vector<2x1x32xf32> to vector<2x32xf32>
    %71 = vector.shape_cast %68 : vector<2x32xf32> to vector<2x1x32xf32>
    tpu.vector_store %arg4[%c0_19, %c1_20, %c0_21], %71 {strides = array<i32>} : memref<2x8x32xf32, #tpu.memory_space<vmem>>, vector<2x1x32xf32>,
    %c2 = arith.constant 2 : index
    %c0_22 = arith.constant 0 : index
    %c0_23 = arith.constant 0 : index
    %72 = vector.load %arg1[%c2, %c0_22, %c0_23] : memref<8x2x96xf32, #tpu.memory_space<vmem>>, vector<1x2x96xf32>
    %73 = vector.shape_cast %72 : vector<1x2x96xf32> to vector<2x96xf32>
    %74 = arith.truncf %68 : vector<2x32xf32> to vector<2x32xbf16>
    %cst_24 = arith.constant dense<0.000000e+00> : vector<2x96xf32>
    %75 = tpu.matmul %74, %3, %cst_24 {dimension_numbers = #tpu.dot_dimension_numbers<[1], [0], [0], [1], [0, 0, 1, 1], [], []>} : vector<2x32xbf16>, vector<32x96xbf16>, vector<2x96xf32> -> vector<2x96xf32>
    %76 = vector.extract_strided_slice %73 {offsets = [0, 0], sizes = [2, 32], strides = [1, 1]} : vector<2x96xf32> to vector<2x32xf32>
    %77 = vector.extract_strided_slice %75 {offsets = [0, 0], sizes = [2, 32], strides = [1, 1]} : vector<2x96xf32> to vector<2x32xf32>
    %78 = arith.addf %76, %77 : vector<2x32xf32>
    %79 = arith.negf %78 : vector<2x32xf32>
    %80 = math.exp %79 : vector<2x32xf32>
    %cst_25 = arith.constant 1.000000e+00 : f32
    %81 = vector.broadcast %cst_25 : f32 to vector<2x32xf32>
    %82 = arith.addf %81, %80 : vector<2x32xf32>
    %83 = arith.divf %81, %82 : vector<2x32xf32>
    %84 = vector.extract_strided_slice %73 {offsets = [0, 32], sizes = [2, 32], strides = [1, 1]} : vector<2x96xf32> to vector<2x32xf32>
    %85 = vector.extract_strided_slice %75 {offsets = [0, 32], sizes = [2, 32], strides = [1, 1]} : vector<2x96xf32> to vector<2x32xf32>
    %86 = arith.addf %84, %85 : vector<2x32xf32>
    %87 = arith.negf %86 : vector<2x32xf32>
    %88 = math.exp %87 : vector<2x32xf32>
    %cst_26 = arith.constant 1.000000e+00 : f32
    %89 = vector.broadcast %cst_26 : f32 to vector<2x32xf32>
    %90 = arith.addf %89, %88 : vector<2x32xf32>
    %91 = arith.divf %89, %90 : vector<2x32xf32>
    %92 = vector.extract_strided_slice %73 {offsets = [0, 64], sizes = [2, 32], strides = [1, 1]} : vector<2x96xf32> to vector<2x32xf32>
    %93 = vector.extract_strided_slice %75 {offsets = [0, 64], sizes = [2, 32], strides = [1, 1]} : vector<2x96xf32> to vector<2x32xf32>
    %94 = vector.broadcast %4 : vector<1x32xf32> to vector<2x32xf32>
    %95 = arith.addf %93, %94 : vector<2x32xf32>
    %96 = arith.mulf %83, %95 : vector<2x32xf32>
    %97 = arith.addf %92, %96 : vector<2x32xf32>
    %98 = math.tanh %97 : vector<2x32xf32>
    %99 = arith.subf %68, %98 : vector<2x32xf32>
    %100 = arith.mulf %91, %99 : vector<2x32xf32>
    %101 = arith.addf %98, %100 : vector<2x32xf32>
    %c0_27 = arith.constant 0 : index
    %c2_28 = arith.constant 2 : index
    %c0_29 = arith.constant 0 : index
    %102 = vector.load %arg4[%c0_27, %c2_28, %c0_29] : memref<2x8x32xf32, #tpu.memory_space<vmem>>, vector<2x1x32xf32>
    %103 = vector.shape_cast %102 : vector<2x1x32xf32> to vector<2x32xf32>
    %104 = vector.shape_cast %101 : vector<2x32xf32> to vector<2x1x32xf32>
    tpu.vector_store %arg4[%c0_27, %c2_28, %c0_29], %104 {strides = array<i32>} : memref<2x8x32xf32, #tpu.memory_space<vmem>>, vector<2x1x32xf32>,
    %c3 = arith.constant 3 : index
    %c0_30 = arith.constant 0 : index
    %c0_31 = arith.constant 0 : index
    %105 = vector.load %arg1[%c3, %c0_30, %c0_31] : memref<8x2x96xf32, #tpu.memory_space<vmem>>, vector<1x2x96xf32>
    %106 = vector.shape_cast %105 : vector<1x2x96xf32> to vector<2x96xf32>
    %107 = arith.truncf %101 : vector<2x32xf32> to vector<2x32xbf16>
    %cst_32 = arith.constant dense<0.000000e+00> : vector<2x96xf32>
    %108 = tpu.matmul %107, %3, %cst_32 {dimension_numbers = #tpu.dot_dimension_numbers<[1], [0], [0], [1], [0, 0, 1, 1], [], []>} : vector<2x32xbf16>, vector<32x96xbf16>, vector<2x96xf32> -> vector<2x96xf32>
    %109 = vector.extract_strided_slice %106 {offsets = [0, 0], sizes = [2, 32], strides = [1, 1]} : vector<2x96xf32> to vector<2x32xf32>
    %110 = vector.extract_strided_slice %108 {offsets = [0, 0], sizes = [2, 32], strides = [1, 1]} : vector<2x96xf32> to vector<2x32xf32>
    %111 = arith.addf %109, %110 : vector<2x32xf32>
    %112 = arith.negf %111 : vector<2x32xf32>
    %113 = math.exp %112 : vector<2x32xf32>
    %cst_33 = arith.constant 1.000000e+00 : f32
    %114 = vector.broadcast %cst_33 : f32 to vector<2x32xf32>
    %115 = arith.addf %114, %113 : vector<2x32xf32>
    %116 = arith.divf %114, %115 : vector<2x32xf32>
    %117 = vector.extract_strided_slice %106 {offsets = [0, 32], sizes = [2, 32], strides = [1, 1]} : vector<2x96xf32> to vector<2x32xf32>
    %118 = vector.extract_strided_slice %108 {offsets = [0, 32], sizes = [2, 32], strides = [1, 1]} : vector<2x96xf32> to vector<2x32xf32>
    %119 = arith.addf %117, %118 : vector<2x32xf32>
    %120 = arith.negf %119 : vector<2x32xf32>
    %121 = math.exp %120 : vector<2x32xf32>
    %cst_34 = arith.constant 1.000000e+00 : f32
    %122 = vector.broadcast %cst_34 : f32 to vector<2x32xf32>
    %123 = arith.addf %122, %121 : vector<2x32xf32>
    %124 = arith.divf %122, %123 : vector<2x32xf32>
    %125 = vector.extract_strided_slice %106 {offsets = [0, 64], sizes = [2, 32], strides = [1, 1]} : vector<2x96xf32> to vector<2x32xf32>
    %126 = vector.extract_strided_slice %108 {offsets = [0, 64], sizes = [2, 32], strides = [1, 1]} : vector<2x96xf32> to vector<2x32xf32>
    %127 = vector.broadcast %4 : vector<1x32xf32> to vector<2x32xf32>
    %128 = arith.addf %126, %127 : vector<2x32xf32>
    %129 = arith.mulf %116, %128 : vector<2x32xf32>
    %130 = arith.addf %125, %129 : vector<2x32xf32>
    %131 = math.tanh %130 : vector<2x32xf32>
    %132 = arith.subf %101, %131 : vector<2x32xf32>
    %133 = arith.mulf %124, %132 : vector<2x32xf32>
    %134 = arith.addf %131, %133 : vector<2x32xf32>
    %c0_35 = arith.constant 0 : index
    %c3_36 = arith.constant 3 : index
    %c0_37 = arith.constant 0 : index
    %135 = vector.load %arg4[%c0_35, %c3_36, %c0_37] : memref<2x8x32xf32, #tpu.memory_space<vmem>>, vector<2x1x32xf32>
    %136 = vector.shape_cast %135 : vector<2x1x32xf32> to vector<2x32xf32>
    %137 = vector.shape_cast %134 : vector<2x32xf32> to vector<2x1x32xf32>
    tpu.vector_store %arg4[%c0_35, %c3_36, %c0_37], %137 {strides = array<i32>} : memref<2x8x32xf32, #tpu.memory_space<vmem>>, vector<2x1x32xf32>,
    %c4 = arith.constant 4 : index
    %c0_38 = arith.constant 0 : index
    %c0_39 = arith.constant 0 : index
    %138 = vector.load %arg1[%c4, %c0_38, %c0_39] : memref<8x2x96xf32, #tpu.memory_space<vmem>>, vector<1x2x96xf32>
    %139 = vector.shape_cast %138 : vector<1x2x96xf32> to vector<2x96xf32>
    %140 = arith.truncf %134 : vector<2x32xf32> to vector<2x32xbf16>
    %cst_40 = arith.constant dense<0.000000e+00> : vector<2x96xf32>
    %141 = tpu.matmul %140, %3, %cst_40 {dimension_numbers = #tpu.dot_dimension_numbers<[1], [0], [0], [1], [0, 0, 1, 1], [], []>} : vector<2x32xbf16>, vector<32x96xbf16>, vector<2x96xf32> -> vector<2x96xf32>
    %142 = vector.extract_strided_slice %139 {offsets = [0, 0], sizes = [2, 32], strides = [1, 1]} : vector<2x96xf32> to vector<2x32xf32>
    %143 = vector.extract_strided_slice %141 {offsets = [0, 0], sizes = [2, 32], strides = [1, 1]} : vector<2x96xf32> to vector<2x32xf32>
    %144 = arith.addf %142, %143 : vector<2x32xf32>
    %145 = arith.negf %144 : vector<2x32xf32>
    %146 = math.exp %145 : vector<2x32xf32>
    %cst_41 = arith.constant 1.000000e+00 : f32
    %147 = vector.broadcast %cst_41 : f32 to vector<2x32xf32>
    %148 = arith.addf %147, %146 : vector<2x32xf32>
    %149 = arith.divf %147, %148 : vector<2x32xf32>
    %150 = vector.extract_strided_slice %139 {offsets = [0, 32], sizes = [2, 32], strides = [1, 1]} : vector<2x96xf32> to vector<2x32xf32>
    %151 = vector.extract_strided_slice %141 {offsets = [0, 32], sizes = [2, 32], strides = [1, 1]} : vector<2x96xf32> to vector<2x32xf32>
    %152 = arith.addf %150, %151 : vector<2x32xf32>
    %153 = arith.negf %152 : vector<2x32xf32>
    %154 = math.exp %153 : vector<2x32xf32>
    %cst_42 = arith.constant 1.000000e+00 : f32
    %155 = vector.broadcast %cst_42 : f32 to vector<2x32xf32>
    %156 = arith.addf %155, %154 : vector<2x32xf32>
    %157 = arith.divf %155, %156 : vector<2x32xf32>
    %158 = vector.extract_strided_slice %139 {offsets = [0, 64], sizes = [2, 32], strides = [1, 1]} : vector<2x96xf32> to vector<2x32xf32>
    %159 = vector.extract_strided_slice %141 {offsets = [0, 64], sizes = [2, 32], strides = [1, 1]} : vector<2x96xf32> to vector<2x32xf32>
    %160 = vector.broadcast %4 : vector<1x32xf32> to vector<2x32xf32>
    %161 = arith.addf %159, %160 : vector<2x32xf32>
    %162 = arith.mulf %149, %161 : vector<2x32xf32>
    %163 = arith.addf %158, %162 : vector<2x32xf32>
    %164 = math.tanh %163 : vector<2x32xf32>
    %165 = arith.subf %134, %164 : vector<2x32xf32>
    %166 = arith.mulf %157, %165 : vector<2x32xf32>
    %167 = arith.addf %164, %166 : vector<2x32xf32>
    %c0_43 = arith.constant 0 : index
    %c4_44 = arith.constant 4 : index
    %c0_45 = arith.constant 0 : index
    %168 = vector.load %arg4[%c0_43, %c4_44, %c0_45] : memref<2x8x32xf32, #tpu.memory_space<vmem>>, vector<2x1x32xf32>
    %169 = vector.shape_cast %168 : vector<2x1x32xf32> to vector<2x32xf32>
    %170 = vector.shape_cast %167 : vector<2x32xf32> to vector<2x1x32xf32>
    tpu.vector_store %arg4[%c0_43, %c4_44, %c0_45], %170 {strides = array<i32>} : memref<2x8x32xf32, #tpu.memory_space<vmem>>, vector<2x1x32xf32>,
    %c5 = arith.constant 5 : index
    %c0_46 = arith.constant 0 : index
    %c0_47 = arith.constant 0 : index
    %171 = vector.load %arg1[%c5, %c0_46, %c0_47] : memref<8x2x96xf32, #tpu.memory_space<vmem>>, vector<1x2x96xf32>
    %172 = vector.shape_cast %171 : vector<1x2x96xf32> to vector<2x96xf32>
    %173 = arith.truncf %167 : vector<2x32xf32> to vector<2x32xbf16>
    %cst_48 = arith.constant dense<0.000000e+00> : vector<2x96xf32>
    %174 = tpu.matmul %173, %3, %cst_48 {dimension_numbers = #tpu.dot_dimension_numbers<[1], [0], [0], [1], [0, 0, 1, 1], [], []>} : vector<2x32xbf16>, vector<32x96xbf16>, vector<2x96xf32> -> vector<2x96xf32>
    %175 = vector.extract_strided_slice %172 {offsets = [0, 0], sizes = [2, 32], strides = [1, 1]} : vector<2x96xf32> to vector<2x32xf32>
    %176 = vector.extract_strided_slice %174 {offsets = [0, 0], sizes = [2, 32], strides = [1, 1]} : vector<2x96xf32> to vector<2x32xf32>
    %177 = arith.addf %175, %176 : vector<2x32xf32>
    %178 = arith.negf %177 : vector<2x32xf32>
    %179 = math.exp %178 : vector<2x32xf32>
    %cst_49 = arith.constant 1.000000e+00 : f32
    %180 = vector.broadcast %cst_49 : f32 to vector<2x32xf32>
    %181 = arith.addf %180, %179 : vector<2x32xf32>
    %182 = arith.divf %180, %181 : vector<2x32xf32>
    %183 = vector.extract_strided_slice %172 {offsets = [0, 32], sizes = [2, 32], strides = [1, 1]} : vector<2x96xf32> to vector<2x32xf32>
    %184 = vector.extract_strided_slice %174 {offsets = [0, 32], sizes = [2, 32], strides = [1, 1]} : vector<2x96xf32> to vector<2x32xf32>
    %185 = arith.addf %183, %184 : vector<2x32xf32>
    %186 = arith.negf %185 : vector<2x32xf32>
    %187 = math.exp %186 : vector<2x32xf32>
    %cst_50 = arith.constant 1.000000e+00 : f32
    %188 = vector.broadcast %cst_50 : f32 to vector<2x32xf32>
    %189 = arith.addf %188, %187 : vector<2x32xf32>
    %190 = arith.divf %188, %189 : vector<2x32xf32>
    %191 = vector.extract_strided_slice %172 {offsets = [0, 64], sizes = [2, 32], strides = [1, 1]} : vector<2x96xf32> to vector<2x32xf32>
    %192 = vector.extract_strided_slice %174 {offsets = [0, 64], sizes = [2, 32], strides = [1, 1]} : vector<2x96xf32> to vector<2x32xf32>
    %193 = vector.broadcast %4 : vector<1x32xf32> to vector<2x32xf32>
    %194 = arith.addf %192, %193 : vector<2x32xf32>
    %195 = arith.mulf %182, %194 : vector<2x32xf32>
    %196 = arith.addf %191, %195 : vector<2x32xf32>
    %197 = math.tanh %196 : vector<2x32xf32>
    %198 = arith.subf %167, %197 : vector<2x32xf32>
    %199 = arith.mulf %190, %198 : vector<2x32xf32>
    %200 = arith.addf %197, %199 : vector<2x32xf32>
    %c0_51 = arith.constant 0 : index
    %c5_52 = arith.constant 5 : index
    %c0_53 = arith.constant 0 : index
    %201 = vector.load %arg4[%c0_51, %c5_52, %c0_53] : memref<2x8x32xf32, #tpu.memory_space<vmem>>, vector<2x1x32xf32>
    %202 = vector.shape_cast %201 : vector<2x1x32xf32> to vector<2x32xf32>
    %203 = vector.shape_cast %200 : vector<2x32xf32> to vector<2x1x32xf32>
    tpu.vector_store %arg4[%c0_51, %c5_52, %c0_53], %203 {strides = array<i32>} : memref<2x8x32xf32, #tpu.memory_space<vmem>>, vector<2x1x32xf32>,
    %c6 = arith.constant 6 : index
    %c0_54 = arith.constant 0 : index
    %c0_55 = arith.constant 0 : index
    %204 = vector.load %arg1[%c6, %c0_54, %c0_55] : memref<8x2x96xf32, #tpu.memory_space<vmem>>, vector<1x2x96xf32>
    %205 = vector.shape_cast %204 : vector<1x2x96xf32> to vector<2x96xf32>
    %206 = arith.truncf %200 : vector<2x32xf32> to vector<2x32xbf16>
    %cst_56 = arith.constant dense<0.000000e+00> : vector<2x96xf32>
    %207 = tpu.matmul %206, %3, %cst_56 {dimension_numbers = #tpu.dot_dimension_numbers<[1], [0], [0], [1], [0, 0, 1, 1], [], []>} : vector<2x32xbf16>, vector<32x96xbf16>, vector<2x96xf32> -> vector<2x96xf32>
    %208 = vector.extract_strided_slice %205 {offsets = [0, 0], sizes = [2, 32], strides = [1, 1]} : vector<2x96xf32> to vector<2x32xf32>
    %209 = vector.extract_strided_slice %207 {offsets = [0, 0], sizes = [2, 32], strides = [1, 1]} : vector<2x96xf32> to vector<2x32xf32>
    %210 = arith.addf %208, %209 : vector<2x32xf32>
    %211 = arith.negf %210 : vector<2x32xf32>
    %212 = math.exp %211 : vector<2x32xf32>
    %cst_57 = arith.constant 1.000000e+00 : f32
    %213 = vector.broadcast %cst_57 : f32 to vector<2x32xf32>
    %214 = arith.addf %213, %212 : vector<2x32xf32>
    %215 = arith.divf %213, %214 : vector<2x32xf32>
    %216 = vector.extract_strided_slice %205 {offsets = [0, 32], sizes = [2, 32], strides = [1, 1]} : vector<2x96xf32> to vector<2x32xf32>
    %217 = vector.extract_strided_slice %207 {offsets = [0, 32], sizes = [2, 32], strides = [1, 1]} : vector<2x96xf32> to vector<2x32xf32>
    %218 = arith.addf %216, %217 : vector<2x32xf32>
    %219 = arith.negf %218 : vector<2x32xf32>
    %220 = math.exp %219 : vector<2x32xf32>
    %cst_58 = arith.constant 1.000000e+00 : f32
    %221 = vector.broadcast %cst_58 : f32 to vector<2x32xf32>
    %222 = arith.addf %221, %220 : vector<2x32xf32>
    %223 = arith.divf %221, %222 : vector<2x32xf32>
    %224 = vector.extract_strided_slice %205 {offsets = [0, 64], sizes = [2, 32], strides = [1, 1]} : vector<2x96xf32> to vector<2x32xf32>
    %225 = vector.extract_strided_slice %207 {offsets = [0, 64], sizes = [2, 32], strides = [1, 1]} : vector<2x96xf32> to vector<2x32xf32>
    %226 = vector.broadcast %4 : vector<1x32xf32> to vector<2x32xf32>
    %227 = arith.addf %225, %226 : vector<2x32xf32>
    %228 = arith.mulf %215, %227 : vector<2x32xf32>
    %229 = arith.addf %224, %228 : vector<2x32xf32>
    %230 = math.tanh %229 : vector<2x32xf32>
    %231 = arith.subf %200, %230 : vector<2x32xf32>
    %232 = arith.mulf %223, %231 : vector<2x32xf32>
    %233 = arith.addf %230, %232 : vector<2x32xf32>
    %c0_59 = arith.constant 0 : index
    %c6_60 = arith.constant 6 : index
    %c0_61 = arith.constant 0 : index
    %234 = vector.load %arg4[%c0_59, %c6_60, %c0_61] : memref<2x8x32xf32, #tpu.memory_space<vmem>>, vector<2x1x32xf32>
    %235 = vector.shape_cast %234 : vector<2x1x32xf32> to vector<2x32xf32>
    %236 = vector.shape_cast %233 : vector<2x32xf32> to vector<2x1x32xf32>
    tpu.vector_store %arg4[%c0_59, %c6_60, %c0_61], %236 {strides = array<i32>} : memref<2x8x32xf32, #tpu.memory_space<vmem>>, vector<2x1x32xf32>,
    %c7 = arith.constant 7 : index
    %c0_62 = arith.constant 0 : index
    %c0_63 = arith.constant 0 : index
    %237 = vector.load %arg1[%c7, %c0_62, %c0_63] : memref<8x2x96xf32, #tpu.memory_space<vmem>>, vector<1x2x96xf32>
    %238 = vector.shape_cast %237 : vector<1x2x96xf32> to vector<2x96xf32>
    %239 = arith.truncf %233 : vector<2x32xf32> to vector<2x32xbf16>
    %cst_64 = arith.constant dense<0.000000e+00> : vector<2x96xf32>
    %240 = tpu.matmul %239, %3, %cst_64 {dimension_numbers = #tpu.dot_dimension_numbers<[1], [0], [0], [1], [0, 0, 1, 1], [], []>} : vector<2x32xbf16>, vector<32x96xbf16>, vector<2x96xf32> -> vector<2x96xf32>
    %241 = vector.extract_strided_slice %238 {offsets = [0, 0], sizes = [2, 32], strides = [1, 1]} : vector<2x96xf32> to vector<2x32xf32>
    %242 = vector.extract_strided_slice %240 {offsets = [0, 0], sizes = [2, 32], strides = [1, 1]} : vector<2x96xf32> to vector<2x32xf32>
    %243 = arith.addf %241, %242 : vector<2x32xf32>
    %244 = arith.negf %243 : vector<2x32xf32>
    %245 = math.exp %244 : vector<2x32xf32>
    %cst_65 = arith.constant 1.000000e+00 : f32
    %246 = vector.broadcast %cst_65 : f32 to vector<2x32xf32>
    %247 = arith.addf %246, %245 : vector<2x32xf32>
    %248 = arith.divf %246, %247 : vector<2x32xf32>
    %249 = vector.extract_strided_slice %238 {offsets = [0, 32], sizes = [2, 32], strides = [1, 1]} : vector<2x96xf32> to vector<2x32xf32>
    %250 = vector.extract_strided_slice %240 {offsets = [0, 32], sizes = [2, 32], strides = [1, 1]} : vector<2x96xf32> to vector<2x32xf32>
    %251 = arith.addf %249, %250 : vector<2x32xf32>
    %252 = arith.negf %251 : vector<2x32xf32>
    %253 = math.exp %252 : vector<2x32xf32>
    %cst_66 = arith.constant 1.000000e+00 : f32
    %254 = vector.broadcast %cst_66 : f32 to vector<2x32xf32>
    %255 = arith.addf %254, %253 : vector<2x32xf32>
    %256 = arith.divf %254, %255 : vector<2x32xf32>
    %257 = vector.extract_strided_slice %238 {offsets = [0, 64], sizes = [2, 32], strides = [1, 1]} : vector<2x96xf32> to vector<2x32xf32>
    %258 = vector.extract_strided_slice %240 {offsets = [0, 64], sizes = [2, 32], strides = [1, 1]} : vector<2x96xf32> to vector<2x32xf32>
    %259 = vector.broadcast %4 : vector<1x32xf32> to vector<2x32xf32>
    %260 = arith.addf %258, %259 : vector<2x32xf32>
    %261 = arith.mulf %248, %260 : vector<2x32xf32>
    %262 = arith.addf %257, %261 : vector<2x32xf32>
    %263 = math.tanh %262 : vector<2x32xf32>
    %264 = arith.subf %233, %263 : vector<2x32xf32>
    %265 = arith.mulf %256, %264 : vector<2x32xf32>
    %266 = arith.addf %263, %265 : vector<2x32xf32>
    %c0_67 = arith.constant 0 : index
    %c7_68 = arith.constant 7 : index
    %c0_69 = arith.constant 0 : index
    %267 = vector.load %arg4[%c0_67, %c7_68, %c0_69] : memref<2x8x32xf32, #tpu.memory_space<vmem>>, vector<2x1x32xf32>
    %268 = vector.shape_cast %267 : vector<2x1x32xf32> to vector<2x32xf32>
    %269 = vector.shape_cast %266 : vector<2x32xf32> to vector<2x1x32xf32>
    tpu.vector_store %arg4[%c0_67, %c7_68, %c0_69], %269 {strides = array<i32>} : memref<2x8x32xf32, #tpu.memory_space<vmem>>, vector<2x1x32xf32>,
    %c0_70 = arith.constant 0 : index
    %c0_71 = arith.constant 0 : index
    %270 = vector.load %arg6[%c0_70, %c0_71] : memref<2x32xf32, #tpu.memory_space<vmem>>, vector<2x32xf32>
    tpu.vector_store %arg6[%c0_70, %c0_71], %266 {strides = array<i32>} : memref<2x32xf32, #tpu.memory_space<vmem>>, vector<2x32xf32>,
    %c0_i32_72 = arith.constant 0 : i32
    %271 = arith.cmpi eq, %arg0, %c0_i32_72 : i32
    %272 = arith.extui %271 : i1 to i32
    %c0_i32_73 = arith.constant 0 : i32
    %273 = arith.cmpi ne, %272, %c0_i32_73 : i32
    scf.if %273 {
      %c0_74 = arith.constant 0 : index
      %c0_75 = arith.constant 0 : index
      %c0_76 = arith.constant 0 : index
      %274 = vector.load %arg5[%c0_74, %c0_75, %c0_76] : memref<1x2x32xf32, #tpu.memory_space<vmem>>, vector<1x2x32xf32>
      %275 = vector.shape_cast %274 : vector<1x2x32xf32> to vector<2x32xf32>
      %276 = vector.shape_cast %266 : vector<2x32xf32> to vector<1x2x32xf32>
      tpu.vector_store %arg5[%c0_74, %c0_75, %c0_76], %276 {strides = array<i32>} : memref<1x2x32xf32, #tpu.memory_space<vmem>>, vector<1x2x32xf32>,
    } else {
    }
    return
  }
  func.func @transform_0(%arg0: i32) -> (i32, i32, i32) {
    %c0_i32 = arith.constant 0 : i32
    %c0_i32_0 = arith.constant 0 : i32
    %c0_i32_1 = arith.constant 0 : i32
    return %arg0, %c0_i32, %c0_i32_0 : i32, i32, i32
  }
  func.func @transform_1(%arg0: i32) -> (i32, i32) {
    %c0_i32 = arith.constant 0 : i32
    %c0_i32_0 = arith.constant 0 : i32
    %c0_i32_1 = arith.constant 0 : i32
    return %c0_i32, %c0_i32_0 : i32, i32
  }
  func.func @transform_2(%arg0: i32) -> (i32, i32) {
    %c0_i32 = arith.constant 0 : i32
    %c0_i32_0 = arith.constant 0 : i32
    %c0_i32_1 = arith.constant 0 : i32
    return %c0_i32, %c0_i32_0 : i32, i32
  }
  func.func @transform_3(%arg0: i32) -> (i32, i32, i32) {
    %c0_i32 = arith.constant 0 : i32
    %c0_i32_0 = arith.constant 0 : i32
    %c0_i32_1 = arith.constant 0 : i32
    return %c0_i32, %arg0, %c0_i32_0 : i32, i32, i32
  }
  func.func @transform_4(%arg0: i32) -> (i32, i32, i32) {
    %c0_i32 = arith.constant 0 : i32
    %c0_i32_0 = arith.constant 0 : i32
    %c0_i32_1 = arith.constant 0 : i32
    %c0_i32_2 = arith.constant 0 : i32
    return %c0_i32, %c0_i32_0, %c0_i32_1 : i32, i32, i32
  }
}

</mosaic_0001>

<llo_original>
// kernel: auto_regressive_encoder_pallas.1
$region0: #{auto_regressive_encoder_pallas.1}
  #allocation0 [shape = 'u32[]', space=smem, size = 0x4, offset = 0x4, fixed_abs, tag = 'smem constant byte address 0x4 - core index']
  #allocation1 [shape = 'u32[72,128]{1,0:T(1,128)}', space=vmem, size = 0x9000, scoped, tag = 'internal scratch']
  #allocation2 [shape = 'f32[2,32]{1,0:T(2,128)}', space=vmem, size = 0x400, scoped, tag = 'scratch operand']
  %s0 = inlined_call_operand.vmem [shape: f32[8,2,96], index: 0, kind: input, shape index: {}]
  %s1 = inlined_call_operand.vmem [shape: bf16[32,96], index: 1, kind: input, shape index: {}]
  %s2 = inlined_call_operand.vmem [shape: f32[1,32], index: 2, kind: input, shape index: {}]
  %s3 = inlined_call_operand.hbm [shape: f32[2,8,32], index: 3, kind: output, shape index: {0}]
  %s4 = inlined_call_operand.hbm [shape: f32[1,2,32], index: 4, kind: output, shape index: {1}]
  %5 = xla_tuple %s3, %s4
  %s6 = sld [smem:[#allocation0]]
  $region38: #{auto_regressive_encoder_pallas.1} parent=0
    _
  %s8 = ssub.s32 1, %s6
  %s9 = scalar_select 0, %s8, %s6
  $region1: #{auto_regressive_encoder_pallas.1} parent=0
    #allocation3 [shape = 'u8[8192]{0}', space=vmem, size = 0x2000, scoped, tag = 'output window, operand 0, single buffered']
    #allocation4 [shape = 's32[1]{0}', space=sflag, size = 0x4, scoped, tag = 'scoped memory for auto_regressive_encoder_pallas.1']
    #allocation5 [shape = 'u8[1024]{0}', space=vmem, size = 0x400, scoped, tag = 'output window, operand 1, single buffered']
    #allocation6 [shape = 's32[1]{0}', space=sflag, size = 0x4, scoped, tag = 'scoped memory for auto_regressive_encoder_pallas.1']
    %10 = vsyncpa [#allocation4], 0
    %11 = vsyncpa [#allocation6], 0
    // Predicated region
    $region2: #{auto_regressive_encoder_pallas.1} parent=1 // pred_check
      _
    $region3: #{auto_regressive_encoder_pallas.1} parent=1 // pred_check_branch
      %13 = sbr.rel (0) target = $region5
    $region4: #{auto_regressive_encoder_pallas.1} parent=1 // pred_region
      _
    $region5: #{auto_regressive_encoder_pallas.1} parent=1 // pred_fallthru
      _
    // Predicated region
    $region6: #{auto_regressive_encoder_pallas.1} parent=1 // pred_check
      _
    $region7: #{auto_regressive_encoder_pallas.1} parent=1 // pred_check_branch
      %15 = sbr.rel (0) target = $region9
    $region8: #{auto_regressive_encoder_pallas.1} parent=1 // pred_region
      _
    $region9: #{auto_regressive_encoder_pallas.1} parent=1 // pred_fallthru
      _
    // Predicated region
    $region10: #{auto_regressive_encoder_pallas.1} parent=1 // pred_check
      _
    $region11: #{auto_regressive_encoder_pallas.1} parent=1 // pred_check_branch
      %17 = sbr.rel (0) target = $region13
    $region12: #{auto_regressive_encoder_pallas.1} parent=1 // pred_region
      _
    $region13: #{auto_regressive_encoder_pallas.1} parent=1 // pred_fallthru
      _
    %p19 = scmp.eq.s32.totalorder 0, 0
    // Predicated region
    $region14: #{auto_regressive_encoder_pallas.1} parent=1 // pred_check
      %p20 = pneg %p19
    $region15: #{auto_regressive_encoder_pallas.1} parent=1 // pred_check_branch
      %22 = sbr.rel (%p20) target = $region17
    $region16: #{auto_regressive_encoder_pallas.1} parent=1 // pred_region
      %vm23 = vcmask 254976
      %24 = vst.msk [vmem:[#allocation2] sm:$0x3] %vm23, 0.0
    $region17: #{auto_regressive_encoder_pallas.1} parent=1 // pred_fallthru
      _
    %v25 = vld [vmem:[%s1] sm:$0xf]
    %v26 = vld [vmem:[%s1 + $0x4] sm:$0xf]
    %v27 = vld [vmem:[%s1 + $0x8] sm:$0xf]
    %v28 = vld [vmem:[%s1 + $0xc] sm:$0xf]
    %v29 = vld [vmem:[%s2] sm:$0x1]
    %v30 = vld [vmem:[#allocation2] sm:$0x3]
    %v31 = vld [vmem:[%s0] sm:$0x3]
    %v32 = vpack.c.bf16 %v30, %v30
    %v37 = vunpack.c.l.b16 %v25
    %v38 = vunpack.c.l.b16 %v26
    %v39 = vunpack.c.l.b16 %v27
    %v40 = vunpack.c.l.b16 %v28
    %v41 = vpack.c.b16 %v38, %v37
    %v42 = vpack.c.b16 %v40, %v39
    %vm45 = vcmask 261120
    %v47 = vsel %vm45, %v32, 0
    %49 = vmatpush.bf16.msra.mxu0 0
    %50 = vmatpush.bf16.msra.mxu0 0
    %51 = vmatpush.bf16.msra.mxu0 0
    %52 = vmatpush.bf16.msra.mxu0 0
    %53 = vmatpush.bf16.msra.mxu0 0
    %54 = vmatpush.bf16.msra.mxu0 0
    %55 = vmatpush.bf16.msra.mxu0 %v42
    %56 = vmatpush.bf16.msra.mxu0 %v41
    %57 = vmatmul.bf16.gmra.mxu0 %v47
    %v58 = vpop.f32.mrf.mxu0
    %v59 = vadd.f32 0.0, %v58
    %v60 = vpop.f32.mrf.mxu0
    %61 = vdwg.mxu0
    %v62 = vadd.f32 %v31, %v59
    %v63 = vxor.u32 %v62, 2147483648
    %v64 = vmul.f32 %v63, 1.442695
    %v65 = vpow.pop %v64
    %v66 = vadd.f32 %v65, 1.0
    %v67 = vrcp.pop %v66
    %v68 = vmul.f32 %v66, %v67
    %v69 = vsub.f32 1.0, %v68
    %v70 = vmul.f32 %v67, %v69
    %v71 = vadd.f32 %v67, %v70
    %vm72 = vweird.f32 %v66
    %vm73 = vweird.f32 %v67
    %vm74 = vmor %vm72, %vm73
    %v75 = vsel %vm74, %v67, %v71
    %v76 = vand.u32 2147483647, %v66
    %vm77 = vcmp.eq.f32.partialorder %v76, 8.507059e+37
    %v78 = vand.u32 %v66, 2147483648
    %v79 = vor.u32 1.1754944e-38, %v78
    %v80 = vsel %vm77, %v79, %v75
    %v81 = vmul.f32 1.0, %v80
    %v83 = vperm.slane %v29, 0
    %84 = vrot.lane.b32.xlu0 %v83, 64
    %v85 = vpop.permute.xlu0 %84
    %v87 = vadd.f32 %v59, %v85
    %89 = vrot.lane.b32.xlu0 %v87, 64
    %v90 = vpop.permute.xlu0 %89
    %v92 = vmul.f32 %v81, %v90
    %94 = vrot.lane.b32.xlu0 %v92, 64
    %v95 = vpop.permute.xlu0 %94
    %v97 = vadd.f32 %v31, %v95
    %v98 = vtanh.pop %v97
    %100 = vrot.lane.b32.xlu0 %v98, 64
    %v101 = vpop.permute.xlu0 %100
    %v103 = vsub.f32 %v30, %v101
    %105 = vrot.lane.b32.xlu0 %v103, 32
    %v106 = vpop.permute.xlu0 %105
    %v108 = vmul.f32 %v81, %v106
    %110 = vrot.lane.b32.xlu0 %v108, 32
    %v111 = vpop.permute.xlu0 %110
    %v113 = vadd.f32 %v98, %v111
    %v115 = vrot.slane %v113, 1
    %v116 = vperm.slane %v113, 0
    %v117 = vperm.slane %v115, 0
    %118 = vrot.lane.b32.xlu0 %v116, 64
    %v119 = vpop.permute.xlu0 %118
    %120 = vrot.lane.b32.xlu0 %v117, 64
    %v121 = vpop.permute.xlu0 %120
    %vm124 = vcmask 253952
    %125 = vst.msk [vmem:[#allocation3] sm:$0x1] %vm124, %v119
    %126 = vst.msk [vmem:[#allocation3 + $0x8] sm:$0x1] %vm124, %v121
    %s127 = scalar_lea.vmem %s0, 2
    %v128 = vld [vmem:[%s127] sm:$0x3]
    %v129 = vpack.c.bf16 %v113, %v113
    %131 = vrot.lane.b32.xlu0 %v129, 64
    %v132 = vpop.permute.xlu0 %131
    %v134 = vsel %vm45, %v132, 0
    %136 = vmatpush.bf16.msra.mxu0 0
    %137 = vmatpush.bf16.msra.mxu0 0
    %138 = vmatpush.bf16.msra.mxu0 0
    %139 = vmatpush.bf16.msra.mxu0 0
    %140 = vmatpush.bf16.msra.mxu0 0
    %141 = vmatpush.bf16.msra.mxu0 0
    %142 = vmatpush.bf16.msra.mxu0 %v42
    %143 = vmatpush.bf16.msra.mxu0 %v41
    %144 = vmatmul.bf16.gmra.mxu0 %v134
    %v145 = vpop.f32.mrf.mxu0
    %v146 = vadd.f32 0.0, %v145
    %v147 = vpop.f32.mrf.mxu0
    %148 = vdwg.mxu0
    %v149 = vadd.f32 %v128, %v146
    %v150 = vxor.u32 %v149, 2147483648
    %v151 = vmul.f32 %v150, 1.442695
    %v152 = vpow.pop %v151
    %v153 = vadd.f32 %v152, 1.0
    %v154 = vrcp.pop %v153
    %v155 = vmul.f32 %v153, %v154
    %v156 = vsub.f32 1.0, %v155
    %v157 = vmul.f32 %v154, %v156
    %v158 = vadd.f32 %v154, %v157
    %vm159 = vweird.f32 %v153
    %vm160 = vweird.f32 %v154
    %vm161 = vmor %vm159, %vm160
    %v162 = vsel %vm161, %v154, %v158
    %v163 = vand.u32 2147483647, %v153
    %vm164 = vcmp.eq.f32.partialorder %v163, 8.507059e+37
    %v165 = vand.u32 %v153, 2147483648
    %v166 = vor.u32 1.1754944e-38, %v165
    %v167 = vsel %vm164, %v166, %v162
    %v168 = vmul.f32 1.0, %v167
    %v169 = vadd.f32 %v146, %v85
    %171 = vrot.lane.b32.xlu0 %v169, 64
    %v172 = vpop.permute.xlu0 %171
    %v174 = vmul.f32 %v168, %v172
    %176 = vrot.lane.b32.xlu0 %v174, 64
    %v177 = vpop.permute.xlu0 %176
    %v179 = vadd.f32 %v128, %v177
    %v180 = vtanh.pop %v179
    %v181 = vsub.f32 %v113, %v180
    %183 = vrot.lane.b32.xlu0 %v181, 96
    %v184 = vpop.permute.xlu0 %183
    %v186 = vmul.f32 %v168, %v184
    %188 = vrot.lane.b32.xlu0 %v186, 32
    %v189 = vpop.permute.xlu0 %188
    %v191 = vadd.f32 %v180, %v189
    %v193 = vrot.slane %v191, 1
    %v194 = vperm.slane %v191, 0
    %v195 = vperm.slane %v193, 0
    %196 = vrot.lane.b32.xlu0 %v194, 64
    %v197 = vpop.permute.xlu0 %196
    %198 = vrot.lane.b32.xlu0 %v195, 64
    %v199 = vpop.permute.xlu0 %198
    %202 = vst.msk [vmem:[#allocation3 + $0x1] sm:$0x1] %vm124, %v197
    %203 = vst.msk [vmem:[#allocation3 + $0x9] sm:$0x1] %vm124, %v199
    %s204 = scalar_lea.vmem %s0, 4
    %v205 = vld [vmem:[%s204] sm:$0x3]
    %v206 = vpack.c.bf16 %v191, %v191
    %208 = vrot.lane.b32.xlu0 %v206, 64
    %v209 = vpop.permute.xlu0 %208
    %v211 = vsel %vm45, %v209, 0
    %213 = vmatpush.bf16.msra.mxu0 0
    %214 = vmatpush.bf16.msra.mxu0 0
    %215 = vmatpush.bf16.msra.mxu0 0
    %216 = vmatpush.bf16.msra.mxu0 0
    %217 = vmatpush.bf16.msra.mxu0 0
    %218 = vmatpush.bf16.msra.mxu0 0
    %219 = vmatpush.bf16.msra.mxu0 %v42
    %220 = vmatpush.bf16.msra.mxu0 %v41
    %221 = vmatmul.bf16.gmra.mxu0 %v211
    %v222 = vpop.f32.mrf.mxu0
    %v223 = vadd.f32 0.0, %v222
    %v224 = vpop.f32.mrf.mxu0
    %225 = vdwg.mxu0
    %v226 = vadd.f32 %v205, %v223
    %v227 = vxor.u32 %v226, 2147483648
    %v228 = vmul.f32 %v227, 1.442695
    %v229 = vpow.pop %v228
    %v230 = vadd.f32 %v229, 1.0
    %v231 = vrcp.pop %v230
    %v232 = vmul.f32 %v230, %v231
    %v233 = vsub.f32 1.0, %v232
    %v234 = vmul.f32 %v231, %v233
    %v235 = vadd.f32 %v231, %v234
    %vm236 = vweird.f32 %v230
    %vm237 = vweird.f32 %v231
    %vm238 = vmor %vm236, %vm237
    %v239 = vsel %vm238, %v231, %v235
    %v240 = vand.u32 2147483647, %v230
    %vm241 = vcmp.eq.f32.partialorder %v240, 8.507059e+37
    %v242 = vand.u32 %v230, 2147483648
    %v243 = vor.u32 1.1754944e-38, %v242
    %v244 = vsel %vm241, %v243, %v239
    %v245 = vmul.f32 1.0, %v244
    %v246 = vadd.f32 %v223, %v85
    %248 = vrot.lane.b32.xlu0 %v246, 64
    %v249 = vpop.permute.xlu0 %248
    %v251 = vmul.f32 %v245, %v249
    %253 = vrot.lane.b32.xlu0 %v251, 64
    %v254 = vpop.permute.xlu0 %253
    %v256 = vadd.f32 %v205, %v254
    %v257 = vtanh.pop %v256
    %v258 = vsub.f32 %v191, %v257
    %260 = vrot.lane.b32.xlu0 %v258, 96
    %v261 = vpop.permute.xlu0 %260
    %v263 = vmul.f32 %v245, %v261
    %265 = vrot.lane.b32.xlu0 %v263, 32
    %v266 = vpop.permute.xlu0 %265
    %v268 = vadd.f32 %v257, %v266
    %v270 = vrot.slane %v268, 1
    %v271 = vperm.slane %v268, 0
    %v272 = vperm.slane %v270, 0
    %273 = vrot.lane.b32.xlu0 %v271, 64
    %v274 = vpop.permute.xlu0 %273
    %275 = vrot.lane.b32.xlu0 %v272, 64
    %v276 = vpop.permute.xlu0 %275
    %279 = vst.msk [vmem:[#allocation3 + $0x2] sm:$0x1] %vm124, %v274
    %280 = vst.msk [vmem:[#allocation3 + $0xa] sm:$0x1] %vm124, %v276
    %s281 = scalar_lea.vmem %s0, 6
    %v282 = vld [vmem:[%s281] sm:$0x3]
    %v283 = vpack.c.bf16 %v268, %v268
    %285 = vrot.lane.b32.xlu0 %v283, 64
    %v286 = vpop.permute.xlu0 %285
    %v288 = vsel %vm45, %v286, 0
    %290 = vmatpush.bf16.msra.mxu0 0
    %291 = vmatpush.bf16.msra.mxu0 0
    %292 = vmatpush.bf16.msra.mxu0 0
    %293 = vmatpush.bf16.msra.mxu0 0
    %294 = vmatpush.bf16.msra.mxu0 0
    %295 = vmatpush.bf16.msra.mxu0 0
    %296 = vmatpush.bf16.msra.mxu0 %v42
    %297 = vmatpush.bf16.msra.mxu0 %v41
    %298 = vmatmul.bf16.gmra.mxu0 %v288
    %v299 = vpop.f32.mrf.mxu0
    %v300 = vadd.f32 0.0, %v299
    %v301 = vpop.f32.mrf.mxu0
    %302 = vdwg.mxu0
    %v303 = vadd.f32 %v282, %v300
    %v304 = vxor.u32 %v303, 2147483648
    %v305 = vmul.f32 %v304, 1.442695
    %v306 = vpow.pop %v305
    %v307 = vadd.f32 %v306, 1.0
    %v308 = vrcp.pop %v307
    %v309 = vmul.f32 %v307, %v308
    %v310 = vsub.f32 1.0, %v309
    %v311 = vmul.f32 %v308, %v310
    %v312 = vadd.f32 %v308, %v311
    %vm313 = vweird.f32 %v307
    %vm314 = vweird.f32 %v308
    %vm315 = vmor %vm313, %vm314
    %v316 = vsel %vm315, %v308, %v312
    %v317 = vand.u32 2147483647, %v307
    %vm318 = vcmp.eq.f32.partialorder %v317, 8.507059e+37
    %v319 = vand.u32 %v307, 2147483648
    %v320 = vor.u32 1.1754944e-38, %v319
    %v321 = vsel %vm318, %v320, %v316
    %v322 = vmul.f32 1.0, %v321
    %v323 = vadd.f32 %v300, %v85
    %325 = vrot.lane.b32.xlu0 %v323, 64
    %v326 = vpop.permute.xlu0 %325
    %v328 = vmul.f32 %v322, %v326
    %330 = vrot.lane.b32.xlu0 %v328, 64
    %v331 = vpop.permute.xlu0 %330
    %v333 = vadd.f32 %v282, %v331
    %v334 = vtanh.pop %v333
    %v335 = vsub.f32 %v268, %v334
    %337 = vrot.lane.b32.xlu0 %v335, 96
    %v338 = vpop.permute.xlu0 %337
    %v340 = vmul.f32 %v322, %v338
    %342 = vrot.lane.b32.xlu0 %v340, 32
    %v343 = vpop.permute.xlu0 %342
    %v345 = vadd.f32 %v334, %v343
    %v347 = vrot.slane %v345, 1
    %v348 = vperm.slane %v345, 0
    %v349 = vperm.slane %v347, 0
    %350 = vrot.lane.b32.xlu0 %v348, 64
    %v351 = vpop.permute.xlu0 %350
    %352 = vrot.lane.b32.xlu0 %v349, 64
    %v353 = vpop.permute.xlu0 %352
    %356 = vst.msk [vmem:[#allocation3 + $0x3] sm:$0x1] %vm124, %v351
    %357 = vst.msk [vmem:[#allocation3 + $0xb] sm:$0x1] %vm124, %v353
    %s358 = scalar_lea.vmem %s0, 8
    %v359 = vld [vmem:[%s358] sm:$0x3]
    %v360 = vpack.c.bf16 %v345, %v345
    %362 = vrot.lane.b32.xlu0 %v360, 64
    %v363 = vpop.permute.xlu0 %362
    %v365 = vsel %vm45, %v363, 0
    %367 = vmatpush.bf16.msra.mxu0 0
    %368 = vmatpush.bf16.msra.mxu0 0
    %369 = vmatpush.bf16.msra.mxu0 0
    %370 = vmatpush.bf16.msra.mxu0 0
    %371 = vmatpush.bf16.msra.mxu0 0
    %372 = vmatpush.bf16.msra.mxu0 0
    %373 = vmatpush.bf16.msra.mxu0 %v42
    %374 = vmatpush.bf16.msra.mxu0 %v41
    %375 = vmatmul.bf16.gmra.mxu0 %v365
    %v376 = vpop.f32.mrf.mxu0
    %v377 = vadd.f32 0.0, %v376
    %v378 = vpop.f32.mrf.mxu0
    %379 = vdwg.mxu0
    %v380 = vadd.f32 %v359, %v377
    %v381 = vxor.u32 %v380, 2147483648
    %v382 = vmul.f32 %v381, 1.442695
    %v383 = vpow.pop %v382
    %v384 = vadd.f32 %v383, 1.0
    %v385 = vrcp.pop %v384
    %v386 = vmul.f32 %v384, %v385
    %v387 = vsub.f32 1.0, %v386
    %v388 = vmul.f32 %v385, %v387
    %v389 = vadd.f32 %v385, %v388
    %vm390 = vweird.f32 %v384
    %vm391 = vweird.f32 %v385
    %vm392 = vmor %vm390, %vm391
    %v393 = vsel %vm392, %v385, %v389
    %v394 = vand.u32 2147483647, %v384
    %vm395 = vcmp.eq.f32.partialorder %v394, 8.507059e+37
    %v396 = vand.u32 %v384, 2147483648
    %v397 = vor.u32 1.1754944e-38, %v396
    %v398 = vsel %vm395, %v397, %v393
    %v399 = vmul.f32 1.0, %v398
    %v400 = vadd.f32 %v377, %v85
    %402 = vrot.lane.b32.xlu0 %v400, 64
    %v403 = vpop.permute.xlu0 %402
    %v405 = vmul.f32 %v399, %v403
    %407 = vrot.lane.b32.xlu0 %v405, 64
    %v408 = vpop.permute.xlu0 %407
    %v410 = vadd.f32 %v359, %v408
    %v411 = vtanh.pop %v410
    %v412 = vsub.f32 %v345, %v411
    %414 = vrot.lane.b32.xlu0 %v412, 96
    %v415 = vpop.permute.xlu0 %414
    %v417 = vmul.f32 %v399, %v415
    %419 = vrot.lane.b32.xlu0 %v417, 32
    %v420 = vpop.permute.xlu0 %419
    %v422 = vadd.f32 %v411, %v420
    %v424 = vrot.slane %v422, 1
    %v425 = vperm.slane %v422, 0
    %v426 = vperm.slane %v424, 0
    %427 = vrot.lane.b32.xlu0 %v425, 64
    %v428 = vpop.permute.xlu0 %427
    %429 = vrot.lane.b32.xlu0 %v426, 64
    %v430 = vpop.permute.xlu0 %429
    %433 = vst.msk [vmem:[#allocation3 + $0x4] sm:$0x1] %vm124, %v428
    %434 = vst.msk [vmem:[#allocation3 + $0xc] sm:$0x1] %vm124, %v430
    %s435 = scalar_lea.vmem %s0, 10
    %v436 = vld [vmem:[%s435] sm:$0x3]
    %v437 = vpack.c.bf16 %v422, %v422
    %439 = vrot.lane.b32.xlu0 %v437, 64
    %v440 = vpop.permute.xlu0 %439
    %v442 = vsel %vm45, %v440, 0
    %444 = vmatpush.bf16.msra.mxu0 0
    %445 = vmatpush.bf16.msra.mxu0 0
    %446 = vmatpush.bf16.msra.mxu0 0
    %447 = vmatpush.bf16.msra.mxu0 0
    %448 = vmatpush.bf16.msra.mxu0 0
    %449 = vmatpush.bf16.msra.mxu0 0
    %450 = vmatpush.bf16.msra.mxu0 %v42
    %451 = vmatpush.bf16.msra.mxu0 %v41
    %452 = vmatmul.bf16.gmra.mxu0 %v442
    %v453 = vpop.f32.mrf.mxu0
    %v454 = vadd.f32 0.0, %v453
    %v455 = vpop.f32.mrf.mxu0
    %456 = vdwg.mxu0
    %v457 = vadd.f32 %v436, %v454
    %v458 = vxor.u32 %v457, 2147483648
    %v459 = vmul.f32 %v458, 1.442695
    %v460 = vpow.pop %v459
    %v461 = vadd.f32 %v460, 1.0
    %v462 = vrcp.pop %v461
    %v463 = vmul.f32 %v461, %v462
    %v464 = vsub.f32 1.0, %v463
    %v465 = vmul.f32 %v462, %v464
    %v466 = vadd.f32 %v462, %v465
    %vm467 = vweird.f32 %v461
    %vm468 = vweird.f32 %v462
    %vm469 = vmor %vm467, %vm468
    %v470 = vsel %vm469, %v462, %v466
    %v471 = vand.u32 2147483647, %v461
    %vm472 = vcmp.eq.f32.partialorder %v471, 8.507059e+37
    %v473 = vand.u32 %v461, 2147483648
    %v474 = vor.u32 1.1754944e-38, %v473
    %v475 = vsel %vm472, %v474, %v470
    %v476 = vmul.f32 1.0, %v475
    %v477 = vadd.f32 %v454, %v85
    %479 = vrot.lane.b32.xlu0 %v477, 64
    %v480 = vpop.permute.xlu0 %479
    %v482 = vmul.f32 %v476, %v480
    %484 = vrot.lane.b32.xlu0 %v482, 64
    %v485 = vpop.permute.xlu0 %484
    %v487 = vadd.f32 %v436, %v485
    %v488 = vtanh.pop %v487
    %v489 = vsub.f32 %v422, %v488
    %491 = vrot.lane.b32.xlu0 %v489, 96
    %v492 = vpop.permute.xlu0 %491
    %v494 = vmul.f32 %v476, %v492
    %496 = vrot.lane.b32.xlu0 %v494, 32
    %v497 = vpop.permute.xlu0 %496
    %v499 = vadd.f32 %v488, %v497
    %v501 = vrot.slane %v499, 1
    %v502 = vperm.slane %v499, 0
    %v503 = vperm.slane %v501, 0
    %504 = vrot.lane.b32.xlu0 %v502, 64
    %v505 = vpop.permute.xlu0 %504
    %506 = vrot.lane.b32.xlu0 %v503, 64
    %v507 = vpop.permute.xlu0 %506
    %510 = vst.msk [vmem:[#allocation3 + $0x5] sm:$0x1] %vm124, %v505
    %511 = vst.msk [vmem:[#allocation3 + $0xd] sm:$0x1] %vm124, %v507
    %s512 = scalar_lea.vmem %s0, 12
    %v513 = vld [vmem:[%s512] sm:$0x3]
    %v514 = vpack.c.bf16 %v499, %v499
    %516 = vrot.lane.b32.xlu0 %v514, 64
    %v517 = vpop.permute.xlu0 %516
    %v519 = vsel %vm45, %v517, 0
    %521 = vmatpush.bf16.msra.mxu0 0
    %522 = vmatpush.bf16.msra.mxu0 0
    %523 = vmatpush.bf16.msra.mxu0 0
    %524 = vmatpush.bf16.msra.mxu0 0
    %525 = vmatpush.bf16.msra.mxu0 0
    %526 = vmatpush.bf16.msra.mxu0 0
    %527 = vmatpush.bf16.msra.mxu0 %v42
    %528 = vmatpush.bf16.msra.mxu0 %v41
    %529 = vmatmul.bf16.gmra.mxu0 %v519
    %v530 = vpop.f32.mrf.mxu0
    %v531 = vadd.f32 0.0, %v530
    %v532 = vpop.f32.mrf.mxu0
    %533 = vdwg.mxu0
    %v534 = vadd.f32 %v513, %v531
    %v535 = vxor.u32 %v534, 2147483648
    %v536 = vmul.f32 %v535, 1.442695
    %v537 = vpow.pop %v536
    %v538 = vadd.f32 %v537, 1.0
    %v539 = vrcp.pop %v538
    %v540 = vmul.f32 %v538, %v539
    %v541 = vsub.f32 1.0, %v540
    %v542 = vmul.f32 %v539, %v541
    %v543 = vadd.f32 %v539, %v542
    %vm544 = vweird.f32 %v538
    %vm545 = vweird.f32 %v539
    %vm546 = vmor %vm544, %vm545
    %v547 = vsel %vm546, %v539, %v543
    %v548 = vand.u32 2147483647, %v538
    %vm549 = vcmp.eq.f32.partialorder %v548, 8.507059e+37
    %v550 = vand.u32 %v538, 2147483648
    %v551 = vor.u32 1.1754944e-38, %v550
    %v552 = vsel %vm549, %v551, %v547
    %v553 = vmul.f32 1.0, %v552
    %v554 = vadd.f32 %v531, %v85
    %556 = vrot.lane.b32.xlu0 %v554, 64
    %v557 = vpop.permute.xlu0 %556
    %v559 = vmul.f32 %v553, %v557
    %561 = vrot.lane.b32.xlu0 %v559, 64
    %v562 = vpop.permute.xlu0 %561
    %v564 = vadd.f32 %v513, %v562
    %v565 = vtanh.pop %v564
    %v566 = vsub.f32 %v499, %v565
    %568 = vrot.lane.b32.xlu0 %v566, 96
    %v569 = vpop.permute.xlu0 %568
    %v571 = vmul.f32 %v553, %v569
    %573 = vrot.lane.b32.xlu0 %v571, 32
    %v574 = vpop.permute.xlu0 %573
    %v576 = vadd.f32 %v565, %v574
    %v578 = vrot.slane %v576, 1
    %v579 = vperm.slane %v576, 0
    %v580 = vperm.slane %v578, 0
    %581 = vrot.lane.b32.xlu0 %v579, 64
    %v582 = vpop.permute.xlu0 %581
    %583 = vrot.lane.b32.xlu0 %v580, 64
    %v584 = vpop.permute.xlu0 %583
    %587 = vst.msk [vmem:[#allocation3 + $0x6] sm:$0x1] %vm124, %v582
    %588 = vst.msk [vmem:[#allocation3 + $0xe] sm:$0x1] %vm124, %v584
    %s589 = scalar_lea.vmem %s0, 14
    %v590 = vld [vmem:[%s589] sm:$0x3]
    %v591 = vpack.c.bf16 %v576, %v576
    %593 = vrot.lane.b32.xlu0 %v591, 64
    %v594 = vpop.permute.xlu0 %593
    %v596 = vsel %vm45, %v594, 0
    %598 = vmatpush.bf16.msra.mxu0 0
    %599 = vmatpush.bf16.msra.mxu0 0
    %600 = vmatpush.bf16.msra.mxu0 0
    %601 = vmatpush.bf16.msra.mxu0 0
    %602 = vmatpush.bf16.msra.mxu0 0
    %603 = vmatpush.bf16.msra.mxu0 0
    %604 = vmatpush.bf16.msra.mxu0 %v42
    %605 = vmatpush.bf16.msra.mxu0 %v41
    %606 = vmatmul.bf16.gmra.mxu0 %v596
    %v607 = vpop.f32.mrf.mxu0
    %v608 = vadd.f32 0.0, %v607
    %v609 = vpop.f32.mrf.mxu0
    %610 = vdwg.mxu0
    %v611 = vadd.f32 %v590, %v608
    %v612 = vxor.u32 %v611, 2147483648
    %v613 = vmul.f32 %v612, 1.442695
    %v614 = vpow.pop %v613
    %v615 = vadd.f32 %v614, 1.0
    %v616 = vrcp.pop %v615
    %v617 = vmul.f32 %v615, %v616
    %v618 = vsub.f32 1.0, %v617
    %v619 = vmul.f32 %v616, %v618
    %v620 = vadd.f32 %v616, %v619
    %vm621 = vweird.f32 %v615
    %vm622 = vweird.f32 %v616
    %vm623 = vmor %vm621, %vm622
    %v624 = vsel %vm623, %v616, %v620
    %v625 = vand.u32 2147483647, %v615
    %vm626 = vcmp.eq.f32.partialorder %v625, 8.507059e+37
    %v627 = vand.u32 %v615, 2147483648
    %v628 = vor.u32 1.1754944e-38, %v627
    %v629 = vsel %vm626, %v628, %v624
    %v630 = vmul.f32 1.0, %v629
    %v631 = vadd.f32 %v608, %v85
    %633 = vrot.lane.b32.xlu0 %v631, 64
    %v634 = vpop.permute.xlu0 %633
    %v636 = vmul.f32 %v630, %v634
    %638 = vrot.lane.b32.xlu0 %v636, 64
    %v639 = vpop.permute.xlu0 %638
    %v641 = vadd.f32 %v590, %v639
    %v642 = vtanh.pop %v641
    %v643 = vsub.f32 %v576, %v642
    %645 = vrot.lane.b32.xlu0 %v643, 96
    %v646 = vpop.permute.xlu0 %645
    %v648 = vmul.f32 %v630, %v646
    %650 = vrot.lane.b32.xlu0 %v648, 32
    %v651 = vpop.permute.xlu0 %650
    %v653 = vadd.f32 %v642, %v651
    %v655 = vrot.slane %v653, 1
    %v656 = vperm.slane %v653, 0
    %v657 = vperm.slane %v655, 0
    %658 = vrot.lane.b32.xlu0 %v656, 64
    %v659 = vpop.permute.xlu0 %658
    %660 = vrot.lane.b32.xlu0 %v657, 64
    %v661 = vpop.permute.xlu0 %660
    %664 = vst.msk [vmem:[#allocation3 + $0x7] sm:$0x1] %vm124, %v659
    %665 = vst.msk [vmem:[#allocation3 + $0xf] sm:$0x1] %vm124, %v661
    %666 = vrot.lane.b32.xlu0 %v653, 64
    %v667 = vpop.permute.xlu0 %666
    %vm669 = vcmask 254976
    %670 = vst.msk [vmem:[#allocation2] sm:$0x3] %vm669, %v667
    // Predicated region
    $region18: #{auto_regressive_encoder_pallas.1} parent=1 // pred_check
      %p671 = pneg %p19
    $region19: #{auto_regressive_encoder_pallas.1} parent=1 // pred_check_branch
      %673 = sbr.rel (%p671) target = $region21
    $region20: #{auto_regressive_encoder_pallas.1} parent=1 // pred_region
      %674 = vst.msk [vmem:[#allocation5] sm:$0x3] %vm669, %v667
    $region21: #{auto_regressive_encoder_pallas.1} parent=1 // pred_fallthru
      _
    // Predicated region
    $region22: #{auto_regressive_encoder_pallas.1} parent=1 // pred_check
      _
    $region23: #{auto_regressive_encoder_pallas.1} parent=1 // pred_check_branch
      %676 = sbr.rel (0) target = $region25
    $region24: #{auto_regressive_encoder_pallas.1} parent=1 // pred_region
      %678 = vsyncadd [#allocation4], 0
      %s679 = sshll.u32 [#allocation3], 4
      %s680 = int_to_ptr.vmem [resolvable:$true] %s679
      %s681 = sshll.u32 %s3, 4
      %s682 = int_to_ptr.hbm [resolvable:$true] %s681
      %687 = dma.vmem_to_hbm [thread:$0]  %s680, 256, %s682, [#allocation4], 128, 128, 8
    $region25: #{auto_regressive_encoder_pallas.1} parent=1 // pred_fallthru
      _
    // Predicated region
    $region26: #{auto_regressive_encoder_pallas.1} parent=1 // pred_check
      _
    $region27: #{auto_regressive_encoder_pallas.1} parent=1 // pred_check_branch
      %689 = sbr.rel (0) target = $region29
    $region28: #{auto_regressive_encoder_pallas.1} parent=1 // pred_region
      %691 = vsyncadd [#allocation6], 0
      %s693 = sshll.u32 [#allocation5], 4
      %s694 = int_to_ptr.vmem [resolvable:$true] %s693
      %s695 = sshll.u32 %s4, 4
      %s696 = int_to_ptr.hbm [resolvable:$true] %s695
      %698 = dma.vmem_to_hbm [thread:$0]  %s694, 32, %s696, [#allocation6]
    $region29: #{auto_regressive_encoder_pallas.1} parent=1 // pred_fallthru
      _
    // Predicated region
    $region30: #{auto_regressive_encoder_pallas.1} parent=1 // pred_check
      _
    $region31: #{auto_regressive_encoder_pallas.1} parent=1 // pred_check_branch
      %700 = sbr.rel (0) target = $region33
    $region32: #{auto_regressive_encoder_pallas.1} parent=1 // pred_region
      %702 = dma.done [#allocation4], 256
    $region33: #{auto_regressive_encoder_pallas.1} parent=1 // pred_fallthru
      _
    // Predicated region
    $region34: #{auto_regressive_encoder_pallas.1} parent=1 // pred_check
      _
    $region35: #{auto_regressive_encoder_pallas.1} parent=1 // pred_check_branch
      %704 = sbr.rel (0) target = $region37
    $region36: #{auto_regressive_encoder_pallas.1} parent=1 // pred_region
      %706 = dma.done [#allocation6], 32
    $region37: #{auto_regressive_encoder_pallas.1} parent=1 // pred_fallthru
      _
    %707 = vsyncpa [#allocation4], 1
    %708 = vsyncpa [#allocation6], 1

</llo_original>
